<compile_context>
chip_gen: v7x
topology: tpu7x:2x2x1
jax: 0.10.0
libtpu: 0.0.40
codegen_flags: <defaults>
</compile_context>

<pallas_src>
import jax
import jax.numpy as jnp
from jax import lax
from jax.experimental import pallas as pl
from jax.experimental.pallas import tpu as pltpu

LN_EPS = 1e-5
_SQRT_HALF = 0.7071067811865476
_TARGET_TILE_BYTES = 4 * 1024 * 1024  # per-block budget (f32 working copy)


def _erf_f32(x):
    """Abramowitz & Stegun 7.1.26 erf approximation, |error| <= 1.5e-7."""
    p = 0.3275911
    a1, a2, a3, a4, a5 = (0.254829592, -0.284496736, 1.421413741,
                          -1.453152027, 1.061405429)
    ax = jnp.abs(x)
    t = 1.0 / (1.0 + p * ax)
    poly = ((((a5 * t + a4) * t + a3) * t + a2) * t + a1) * t
    y = 1.0 - poly * jnp.exp(-(ax * ax))
    return jnp.where(x < 0, -y, y)


def _gelu_exact(x):
    """PyTorch nn.GELU() default: 0.5 * x * (1 + erf(x / sqrt(2)))."""
    return 0.5 * x * (1.0 + _erf_f32(x * _SQRT_HALF))


def _ln_gelu_kernel(x_ref, g_ref, b_ref, o_ref):
    # x_ref/o_ref: (tile_b, D, tile_l) block; g_ref/b_ref: (1, D, 1) params.
    x = x_ref[...].astype(jnp.float32)
    d = x.shape[1]
    inv_d = jnp.float32(1.0 / d)
    mean = jnp.sum(x, axis=1, keepdims=True) * inv_d        # (tile_b,1,tile_l)
    xc = x - mean
    var = jnp.sum(xc * xc, axis=1, keepdims=True) * inv_d   # biased var (PyTorch LN)
    inv = lax.rsqrt(var + LN_EPS)                           # (tile_b,1,tile_l)
    scale = inv * g_ref[...].astype(jnp.float32)            # folded affine scale
    z = xc * scale + b_ref[...].astype(jnp.float32)
    o_ref[...] = _gelu_exact(z).astype(o_ref.dtype)


def _choose_tiles(bflat: int, d_model: int, seq_len: int):
    """Pick (tile_b, tile_l) so the (tile_b, D, tile_l) f32 block ~fits budget."""
    slab_bytes = d_model * seq_len * 4
    if slab_bytes <= _TARGET_TILE_BYTES:
        # Full (D, L) per element; pack as many batch elements as fit.
        tile_b = max(1, min(bflat, _TARGET_TILE_BYTES // max(slab_bytes, 1)))
        return tile_b, seq_len
    # Large L: one batch element per block, lane-dense tiles (multiple of 128).
    tile_l = max(128, (_TARGET_TILE_BYTES // (d_model * 4)) // 128 * 128)
    tile_l = min(tile_l, seq_len)
    return 1, tile_l


def layer_norm_gelu(x, gamma, beta):
    """x: (..., D, L); gamma/beta: (D,). Returns GELU(LayerNorm_over_D(x))."""
    orig_shape = x.shape
    d_model, seq_len = orig_shape[-2], orig_shape[-1]
    x3 = x.reshape(-1, d_model, seq_len)
    bflat = x3.shape[0]

    tile_b, tile_l = _choose_tiles(bflat, d_model, seq_len)
    grid = (pl.cdiv(bflat, tile_b), pl.cdiv(seq_len, tile_l))

    g3 = gamma.reshape(1, d_model, 1)
    b3 = beta.reshape(1, d_model, 1)

    out = pl.pallas_call(
        _ln_gelu_kernel,
        out_shape=jax.ShapeDtypeStruct((bflat, d_model, seq_len), x.dtype),
        grid=grid,
        in_specs=[
            pl.BlockSpec((tile_b, d_model, tile_l), lambda b, l: (b, 0, l)),
            pl.BlockSpec((1, d_model, 1), lambda b, l: (0, 0, 0)),
            pl.BlockSpec((1, d_model, 1), lambda b, l: (0, 0, 0)),
        ],
        out_specs=pl.BlockSpec((tile_b, d_model, tile_l), lambda b, l: (b, 0, l)),
        compiler_params=pltpu.CompilerParams(
            dimension_semantics=("parallel", "parallel"),
            vmem_limit_bytes=64 * 1024 * 1024,
        ),
    )(x3, g3, b3)
    return out.reshape(orig_shape)


layer_norm_gelu = jax.jit(layer_norm_gelu)


def _reference(x, gamma, beta):
    # Pure-JAX reference mirroring the PyTorch module (exact erf GELU).
    xt = jnp.swapaxes(x, -1, -2).astype(jnp.float32)
    mean = jnp.mean(xt, axis=-1, keepdims=True)
    var = jnp.mean((xt - mean) ** 2, axis=-1, keepdims=True)
    y = (xt - mean) * lax.rsqrt(var + LN_EPS) * gamma + beta
    y = jnp.swapaxes(y, -1, -2)
    return (0.5 * y * (1.0 + lax.erf(y * _SQRT_HALF))).astype(x.dtype)


if __name__ == "__main__":
    B, D, L = 2, 32, 16  # (batch, channels normalized by LayerNorm, seq)

    key = jax.random.PRNGKey(0)
    kx, kg, kb = jax.random.split(key, 3)
    x = jax.random.normal(kx, (B, D, L), dtype=jnp.float32)
    gamma = 1.0 + 0.1 * jax.random.normal(kg, (D,), dtype=jnp.float32)
    beta = 0.1 * jax.random.normal(kb, (D,), dtype=jnp.float32)

    out = layer_norm_gelu(x, gamma, beta)
    out = jax.block_until_ready(out)

    ref = _reference(x, gamma, beta)
    assert out.shape == x.shape
    assert jnp.allclose(out, ref, atol=1e-5, rtol=1e-4), "mismatch vs reference"

    print("KERNEL_OK")
</pallas_src>

<mosaic_0001>
module attributes {stable_mosaic.version = 11 : i64} {
  func.func @_ln_gelu_kernel(%arg0: i32, %arg1: i32, %arg2: memref<2x32x16xf32, #tpu.memory_space<vmem>>, %arg3: memref<1x32x1xf32, #tpu.memory_space<vmem>>, %arg4: memref<1x32x1xf32, #tpu.memory_space<vmem>>, %arg5: memref<2x32x16xf32, #tpu.memory_space<vmem>>) attributes {dimension_semantics = [#tpu.dimension_semantics<parallel>, #tpu.dimension_semantics<parallel>], iteration_bounds = array<i64: 1, 1>, scalar_prefetch = 0 : i64, scratch_operands = 0 : i64, tpu.core_type = #tpu.core_type<tc>, window_params = [{transform_indices = @transform_0, window_bounds = array<i64: 2, 32, 16>}, {pipeline_mode = #tpu.pipeline_mode<synchronous>, transform_indices = @transform_1, window_bounds = array<i64: 1, 32, 1>}, {pipeline_mode = #tpu.pipeline_mode<synchronous>, transform_indices = @transform_2, window_bounds = array<i64: 1, 32, 1>}, {transform_indices = @transform_3, window_bounds = array<i64: 2, 32, 16>}]} {
    %c0 = arith.constant 0 : index
    %c0_0 = arith.constant 0 : index
    %c0_1 = arith.constant 0 : index
    %0 = vector.load %arg2[%c0, %c0_0, %c0_1] : memref<2x32x16xf32, #tpu.memory_space<vmem>>, vector<2x32x16xf32>
    %cst = arith.constant dense<0.000000e+00> : vector<2x16xf32>
    %1 = vector.multi_reduction <add>, %0, %cst [1] : vector<2x32x16xf32> to vector<2x16xf32>
    %2 = vector.shape_cast %1 : vector<2x16xf32> to vector<2x1x16xf32>
    %cst_2 = arith.constant 3.125000e-02 : f32
    %3 = vector.broadcast %cst_2 : f32 to vector<2x1x16xf32>
    %4 = arith.mulf %2, %3 : vector<2x1x16xf32>
    %5 = vector.broadcast %4 : vector<2x1x16xf32> to vector<2x32x16xf32>
    %6 = arith.subf %0, %5 : vector<2x32x16xf32>
    %7 = arith.mulf %6, %6 : vector<2x32x16xf32>
    %cst_3 = arith.constant dense<0.000000e+00> : vector<2x16xf32>
    %8 = vector.multi_reduction <add>, %7, %cst_3 [1] : vector<2x32x16xf32> to vector<2x16xf32>
    %9 = vector.shape_cast %8 : vector<2x16xf32> to vector<2x1x16xf32>
    %cst_4 = arith.constant 3.125000e-02 : f32
    %10 = vector.broadcast %cst_4 : f32 to vector<2x1x16xf32>
    %11 = arith.mulf %9, %10 : vector<2x1x16xf32>
    %cst_5 = arith.constant 9.99999974E-6 : f32
    %12 = vector.broadcast %cst_5 : f32 to vector<2x1x16xf32>
    %13 = arith.addf %11, %12 : vector<2x1x16xf32>
    %14 = math.rsqrt %13 : vector<2x1x16xf32>
    %c0_6 = arith.constant 0 : index
    %c0_7 = arith.constant 0 : index
    %c0_8 = arith.constant 0 : index
    %15 = vector.load %arg3[%c0_6, %c0_7, %c0_8] : memref<1x32x1xf32, #tpu.memory_space<vmem>>, vector<1x32x1xf32>
    %16 = vector.broadcast %14 : vector<2x1x16xf32> to vector<2x32x16xf32>
    %17 = vector.broadcast %15 : vector<1x32x1xf32> to vector<2x32x16xf32>
    %18 = arith.mulf %16, %17 : vector<2x32x16xf32>
    %19 = arith.mulf %6, %18 : vector<2x32x16xf32>
    %c0_9 = arith.constant 0 : index
    %c0_10 = arith.constant 0 : index
    %c0_11 = arith.constant 0 : index
    %20 = vector.load %arg4[%c0_9, %c0_10, %c0_11] : memref<1x32x1xf32, #tpu.memory_space<vmem>>, vector<1x32x1xf32>
    %21 = vector.broadcast %20 : vector<1x32x1xf32> to vector<2x32x16xf32>
    %22 = arith.addf %19, %21 : vector<2x32x16xf32>
    %cst_12 = arith.constant 5.000000e-01 : f32
    %23 = vector.broadcast %cst_12 : f32 to vector<2x32x16xf32>
    %24 = arith.mulf %23, %22 : vector<2x32x16xf32>
    %cst_13 = arith.constant 0.707106769 : f32
    %25 = vector.broadcast %cst_13 : f32 to vector<2x32x16xf32>
    %26 = arith.mulf %22, %25 : vector<2x32x16xf32>
    %27 = math.absf %26 : vector<2x32x16xf32>
    %cst_14 = arith.constant 0.327591091 : f32
    %28 = vector.broadcast %cst_14 : f32 to vector<2x32x16xf32>
    %29 = arith.mulf %28, %27 : vector<2x32x16xf32>
    %cst_15 = arith.constant 1.000000e+00 : f32
    %30 = vector.broadcast %cst_15 : f32 to vector<2x32x16xf32>
    %31 = arith.addf %30, %29 : vector<2x32x16xf32>
    %cst_16 = arith.constant 1.000000e+00 : f32
    %32 = vector.broadcast %cst_16 : f32 to vector<2x32x16xf32>
    %33 = arith.divf %32, %31 : vector<2x32x16xf32>
    %cst_17 = arith.constant 1.06140542 : f32
    %34 = vector.broadcast %cst_17 : f32 to vector<2x32x16xf32>
    %35 = arith.mulf %34, %33 : vector<2x32x16xf32>
    %cst_18 = arith.constant -1.45315206 : f32
    %36 = vector.broadcast %cst_18 : f32 to vector<2x32x16xf32>
    %37 = arith.addf %35, %36 : vector<2x32x16xf32>
    %38 = arith.mulf %37, %33 : vector<2x32x16xf32>
    %cst_19 = arith.constant 1.42141378 : f32
    %39 = vector.broadcast %cst_19 : f32 to vector<2x32x16xf32>
    %40 = arith.addf %38, %39 : vector<2x32x16xf32>
    %41 = arith.mulf %40, %33 : vector<2x32x16xf32>
    %cst_20 = arith.constant -0.284496725 : f32
    %42 = vector.broadcast %cst_20 : f32 to vector<2x32x16xf32>
    %43 = arith.addf %41, %42 : vector<2x32x16xf32>
    %44 = arith.mulf %43, %33 : vector<2x32x16xf32>
    %cst_21 = arith.constant 0.254829586 : f32
    %45 = vector.broadcast %cst_21 : f32 to vector<2x32x16xf32>
    %46 = arith.addf %44, %45 : vector<2x32x16xf32>
    %47 = arith.mulf %46, %33 : vector<2x32x16xf32>
    %48 = arith.mulf %27, %27 : vector<2x32x16xf32>
    %cst_22 = arith.constant 0.000000e+00 : f32
    %49 = vector.broadcast %cst_22 : f32 to vector<2x32x16xf32>
    %50 = arith.subf %49, %48 : vector<2x32x16xf32>
    %51 = math.exp %50 : vector<2x32x16xf32>
    %52 = arith.mulf %47, %51 : vector<2x32x16xf32>
    %cst_23 = arith.constant 1.000000e+00 : f32
    %53 = vector.broadcast %cst_23 : f32 to vector<2x32x16xf32>
    %54 = arith.subf %53, %52 : vector<2x32x16xf32>
    %cst_24 = arith.constant 0.000000e+00 : f32
    %55 = vector.broadcast %cst_24 : f32 to vector<2x32x16xf32>
    %56 = arith.cmpf olt, %26, %55 : vector<2x32x16xf32>
    %cst_25 = arith.constant 0.000000e+00 : f32
    %57 = vector.broadcast %cst_25 : f32 to vector<2x32x16xf32>
    %58 = arith.subf %57, %54 : vector<2x32x16xf32>
    %59 = arith.select %56, %58, %54 : vector<2x32x16xi1>, vector<2x32x16xf32>
    %cst_26 = arith.constant 1.000000e+00 : f32
    %60 = vector.broadcast %cst_26 : f32 to vector<2x32x16xf32>
    %61 = arith.addf %60, %59 : vector<2x32x16xf32>
    %62 = arith.mulf %24, %61 : vector<2x32x16xf32>
    %c0_27 = arith.constant 0 : index
    %c0_28 = arith.constant 0 : index
    %c0_29 = arith.constant 0 : index
    %63 = vector.load %arg5[%c0_27, %c0_28, %c0_29] : memref<2x32x16xf32, #tpu.memory_space<vmem>>, vector<2x32x16xf32>
    tpu.vector_store %arg5[%c0_27, %c0_28, %c0_29], %62 {strides = array<i32>} : memref<2x32x16xf32, #tpu.memory_space<vmem>>, vector<2x32x16xf32>,
    return
  }
  func.func @transform_0(%arg0: i32, %arg1: i32) -> (i32, i32, i32) {
    %c0_i32 = arith.constant 0 : i32
    %c0_i32_0 = arith.constant 0 : i32
    return %arg0, %c0_i32, %arg1 : i32, i32, i32
  }
  func.func @transform_1(%arg0: i32, %arg1: i32) -> (i32, i32, i32) {
    %c0_i32 = arith.constant 0 : i32
    %c0_i32_0 = arith.constant 0 : i32
    %c0_i32_1 = arith.constant 0 : i32
    %c0_i32_2 = arith.constant 0 : i32
    return %c0_i32, %c0_i32_0, %c0_i32_1 : i32, i32, i32
  }
  func.func @transform_2(%arg0: i32, %arg1: i32) -> (i32, i32, i32) {
    %c0_i32 = arith.constant 0 : i32
    %c0_i32_0 = arith.constant 0 : i32
    %c0_i32_1 = arith.constant 0 : i32
    %c0_i32_2 = arith.constant 0 : i32
    return %c0_i32, %c0_i32_0, %c0_i32_1 : i32, i32, i32
  }
  func.func @transform_3(%arg0: i32, %arg1: i32) -> (i32, i32, i32) {
    %c0_i32 = arith.constant 0 : i32
    %c0_i32_0 = arith.constant 0 : i32
    return %arg0, %c0_i32, %arg1 : i32, i32, i32
  }
}

</mosaic_0001>

<llo_original>
// kernel: layer_norm_gelu.1
$region0: #{layer_norm_gelu.1}
  #allocation0 [shape = 'u32[]', space=smem, size = 0x4, offset = 0x4, fixed_abs, tag = 'smem constant byte address 0x4 - core index']
  #allocation1 [shape = 'u32[144,128]{1,0:T(1,128)}', space=vmem, size = 0x12000, scoped, tag = 'internal scratch']
  %s0 = inlined_call_operand.hbm [shape: f32[2,32,16], index: 0, kind: input, shape index: {}]
  %s1 = inlined_call_operand.hbm [shape: f32[1,32,1], index: 1, kind: input, shape index: {}]
  %s2 = inlined_call_operand.hbm [shape: f32[1,32,1], index: 2, kind: input, shape index: {}]
  %s3 = inlined_call_operand.hbm [shape: f32[2,32,16], index: 3, kind: output, shape index: {}]
  %s4 = sld [smem:[#allocation0]]
  $region34: #{layer_norm_gelu.1} parent=0
    _
  %s6 = ssub.s32 1, %s4
  %s7 = scalar_select 0, %s6, %s4
  $region1: #{layer_norm_gelu.1} parent=0
    #allocation2 [shape = 'u8[32768]{0}', space=vmem, size = 0x8000, scoped, tag = 'input window, operand 0, single buffered']
    #allocation3 [shape = 's32[1]{0}', space=sflag, size = 0x4, scoped, tag = 'scoped memory for layer_norm_gelu.1']
    #allocation4 [shape = 's32[1]{0}', space=sflag, size = 0x4, scoped, tag = 'scoped memory for layer_norm_gelu.1']
    #allocation5 [shape = 'u8[16384]{0}', space=vmem, size = 0x4000, scoped, tag = 'input window, operand 1, single buffered']
    #allocation6 [shape = 's32[1]{0}', space=sflag, size = 0x4, scoped, tag = 'scoped memory for layer_norm_gelu.1']
    #allocation7 [shape = 'u8[16384]{0}', space=vmem, size = 0x4000, scoped, tag = 'input window, operand 2, single buffered']
    #allocation8 [shape = 'u8[32768]{0}', space=vmem, size = 0x8000, scoped, tag = 'output window, operand 0, single buffered']
    %8 = vsyncpa [#allocation3], 0
    %9 = vsyncpa [#allocation6], 0
    %10 = vsyncpa [#allocation4], 0
    // Predicated region
    $region2: #{layer_norm_gelu.1} parent=1 // pred_check
      _
    $region3: #{layer_norm_gelu.1} parent=1 // pred_check_branch
      %12 = sbr.rel (0) target = $region5
    $region4: #{layer_norm_gelu.1} parent=1 // pred_region
      %s14 = ssub.s32 1024, 1024
      %15 = vsyncadd [#allocation3], %s14
      %s16 = sshll.u32 [#allocation2], 4
      %s17 = int_to_ptr.vmem [resolvable:$true] %s16
      %22 = dma.hbm_to_vmem [thread:$0]  %s0, 1024, %s17, [#allocation3], 128, 128, 8
    $region5: #{layer_norm_gelu.1} parent=1 // pred_fallthru
      _
    // Predicated region
    $region6: #{layer_norm_gelu.1} parent=1 // pred_check
      _
    $region7: #{layer_norm_gelu.1} parent=1 // pred_check_branch
      %24 = sbr.rel (0) target = $region9
    $region8: #{layer_norm_gelu.1} parent=1 // pred_region
      %s26 = ssub.s32 512, 512
      %27 = vsyncadd [#allocation6], %s26
      %s28 = sshll.u32 [#allocation5], 4
      %s29 = int_to_ptr.vmem [resolvable:$true] %s28
      %34 = dma.hbm_to_vmem [thread:$0]  %s1, 512, %s29, [#allocation6], 128, 128, 8
    $region9: #{layer_norm_gelu.1} parent=1 // pred_fallthru
      _
    // Predicated region
    $region10: #{layer_norm_gelu.1} parent=1 // pred_check
      _
    $region11: #{layer_norm_gelu.1} parent=1 // pred_check_branch
      %36 = sbr.rel (0) target = $region13
    $region12: #{layer_norm_gelu.1} parent=1 // pred_region
      %s38 = ssub.s32 512, 512
      %39 = vsyncadd [#allocation6], %s38
      %s40 = sshll.u32 [#allocation7], 4
      %s41 = int_to_ptr.vmem [resolvable:$true] %s40
      %46 = dma.hbm_to_vmem [thread:$0]  %s2, 512, %s41, [#allocation6], 128, 128, 8
    $region13: #{layer_norm_gelu.1} parent=1 // pred_fallthru
      _
    // Predicated region
    $region14: #{layer_norm_gelu.1} parent=1 // pred_check
      _
    $region15: #{layer_norm_gelu.1} parent=1 // pred_check_branch
      %48 = sbr.rel (0) target = $region17
    $region16: #{layer_norm_gelu.1} parent=1 // pred_region
      %49 = dma.done [#allocation3], 1024
    $region17: #{layer_norm_gelu.1} parent=1 // pred_fallthru
      _
    // Predicated region
    $region18: #{layer_norm_gelu.1} parent=1 // pred_check
      _
    $region19: #{layer_norm_gelu.1} parent=1 // pred_check_branch
      %51 = sbr.rel (0) target = $region21
    $region20: #{layer_norm_gelu.1} parent=1 // pred_region
      %52 = dma.done [#allocation6], 512
    $region21: #{layer_norm_gelu.1} parent=1 // pred_fallthru
      _
    // Predicated region
    $region22: #{layer_norm_gelu.1} parent=1 // pred_check
      _
    $region23: #{layer_norm_gelu.1} parent=1 // pred_check_branch
      %54 = sbr.rel (0) target = $region25
    $region24: #{layer_norm_gelu.1} parent=1 // pred_region
      %55 = dma.done [#allocation6], 512
    $region25: #{layer_norm_gelu.1} parent=1 // pred_fallthru
      _
    %v56 = vld [vmem:[#allocation2] sm:$0xff]
    %v57 = vld [vmem:[#allocation2 + $0x8] sm:$0xff]
    %v58 = vld [vmem:[#allocation2 + $0x10] sm:$0xff]
    %v59 = vld [vmem:[#allocation2 + $0x18] sm:$0xff]
    %v60 = vld [vmem:[#allocation2 + $0x20] sm:$0xff]
    %v61 = vld [vmem:[#allocation2 + $0x28] sm:$0xff]
    %v62 = vld [vmem:[#allocation2 + $0x30] sm:$0xff]
    %v63 = vld [vmem:[#allocation2 + $0x38] sm:$0xff]
    %vm64 = vcmask 130048
    %v65 = vsel %vm64, %v56, 0.0
    %v66 = vsel %vm64, %v57, 0.0
    %v67 = vadd.f32 %v65, %v66
    %v68 = vsel %vm64, %v58, 0.0
    %v69 = vadd.f32 %v67, %v68
    %v70 = vsel %vm64, %v59, 0.0
    %v71 = vadd.f32 %v69, %v70
    %v72 = vrot.slane %v71, 4
    %v73 = vadd.f32 %v71, %v72
    %v74 = vrot.slane %v73, 2
    %v75 = vadd.f32 %v73, %v74
    %v76 = vrot.slane %v75, 1
    %v77 = vadd.f32 %v75, %v76
    %v78 = vsel %vm64, %v60, 0.0
    %v79 = vsel %vm64, %v61, 0.0
    %v80 = vadd.f32 %v78, %v79
    %v81 = vsel %vm64, %v62, 0.0
    %v82 = vadd.f32 %v80, %v81
    %v83 = vsel %vm64, %v63, 0.0
    %v84 = vadd.f32 %v82, %v83
    %v85 = vrot.slane %v84, 4
    %v86 = vadd.f32 %v84, %v85
    %v87 = vrot.slane %v86, 2
    %v88 = vadd.f32 %v86, %v87
    %v89 = vrot.slane %v88, 1
    %v90 = vadd.f32 %v88, %v89
    %v91 = vmul.f32 %v77, 0.03125
    %v92 = vmul.f32 %v90, 0.03125
    %v93 = vsub.f32 %v56, %v91
    %v94 = vsub.f32 %v57, %v91
    %v95 = vsub.f32 %v58, %v91
    %v96 = vsub.f32 %v59, %v91
    %v97 = vsub.f32 %v60, %v92
    %v98 = vsub.f32 %v61, %v92
    %v99 = vsub.f32 %v62, %v92
    %v100 = vsub.f32 %v63, %v92
    %v101 = vmul.f32 %v93, %v93
    %v102 = vmul.f32 %v94, %v94
    %v103 = vmul.f32 %v95, %v95
    %v104 = vmul.f32 %v96, %v96
    %v105 = vmul.f32 %v97, %v97
    %v106 = vmul.f32 %v98, %v98
    %v107 = vmul.f32 %v99, %v99
    %v108 = vmul.f32 %v100, %v100
    %v109 = vsel %vm64, %v101, 0.0
    %v110 = vsel %vm64, %v102, 0.0
    %v111 = vadd.f32 %v109, %v110
    %v112 = vsel %vm64, %v103, 0.0
    %v113 = vadd.f32 %v111, %v112
    %v114 = vsel %vm64, %v104, 0.0
    %v115 = vadd.f32 %v113, %v114
    %v116 = vrot.slane %v115, 4
    %v117 = vadd.f32 %v115, %v116
    %v118 = vrot.slane %v117, 2
    %v119 = vadd.f32 %v117, %v118
    %v120 = vrot.slane %v119, 1
    %v121 = vadd.f32 %v119, %v120
    %v122 = vsel %vm64, %v105, 0.0
    %v123 = vsel %vm64, %v106, 0.0
    %v124 = vadd.f32 %v122, %v123
    %v125 = vsel %vm64, %v107, 0.0
    %v126 = vadd.f32 %v124, %v125
    %v127 = vsel %vm64, %v108, 0.0
    %v128 = vadd.f32 %v126, %v127
    %v129 = vrot.slane %v128, 4
    %v130 = vadd.f32 %v128, %v129
    %v131 = vrot.slane %v130, 2
    %v132 = vadd.f32 %v130, %v131
    %v133 = vrot.slane %v132, 1
    %v134 = vadd.f32 %v132, %v133
    %v135 = vmul.f32 %v121, 0.03125
    %v136 = vmul.f32 %v134, 0.03125
    %v137 = vadd.f32 %v135, 1e-05
    %v138 = vadd.f32 %v136, 1e-05
    %v139 = vrsqrt.pop %v137
    %v140 = vrsqrt.pop %v138
    %v141 = vld [vmem:[#allocation5] sm:$0xff]
    %v142 = vld [vmem:[#allocation5 + $0x8] sm:$0xff]
    %v143 = vld [vmem:[#allocation5 + $0x10] sm:$0xff]
    %v144 = vld [vmem:[#allocation5 + $0x18] sm:$0xff]
    %146 = vset.pattern.permute.xlu0 0
    %147 = vperm.xlu0 %146, %v141
    %v148 = vpop.permute.xlu0 %147
    %151 = vset.pattern.permute.xlu0 0
    %152 = vperm.xlu0 %151, %v142
    %v153 = vpop.permute.xlu0 %152
    %156 = vset.pattern.permute.xlu0 0
    %157 = vperm.xlu0 %156, %v143
    %v158 = vpop.permute.xlu0 %157
    %161 = vset.pattern.permute.xlu0 0
    %162 = vperm.xlu0 %161, %v144
    %v163 = vpop.permute.xlu0 %162
    %v165 = vmul.f32 %v139, %v148
    %v166 = vmul.f32 %v139, %v153
    %v167 = vmul.f32 %v139, %v158
    %v168 = vmul.f32 %v139, %v163
    %v169 = vmul.f32 %v140, %v148
    %v170 = vmul.f32 %v140, %v153
    %v171 = vmul.f32 %v140, %v158
    %v172 = vmul.f32 %v140, %v163
    %v173 = vmul.f32 %v93, %v165
    %v174 = vmul.f32 %v94, %v166
    %v175 = vmul.f32 %v95, %v167
    %v176 = vmul.f32 %v96, %v168
    %v177 = vmul.f32 %v97, %v169
    %v178 = vmul.f32 %v98, %v170
    %v179 = vmul.f32 %v99, %v171
    %v180 = vmul.f32 %v100, %v172
    %v181 = vld [vmem:[#allocation7] sm:$0xff]
    %v182 = vld [vmem:[#allocation7 + $0x8] sm:$0xff]
    %v183 = vld [vmem:[#allocation7 + $0x10] sm:$0xff]
    %v184 = vld [vmem:[#allocation7 + $0x18] sm:$0xff]
    %186 = vset.pattern.permute.xlu0 0
    %187 = vperm.xlu0 %186, %v181
    %v188 = vpop.permute.xlu0 %187
    %191 = vset.pattern.permute.xlu0 0
    %192 = vperm.xlu0 %191, %v182
    %v193 = vpop.permute.xlu0 %192
    %196 = vset.pattern.permute.xlu0 0
    %197 = vperm.xlu0 %196, %v183
    %v198 = vpop.permute.xlu0 %197
    %201 = vset.pattern.permute.xlu0 0
    %202 = vperm.xlu0 %201, %v184
    %v203 = vpop.permute.xlu0 %202
    %v205 = vadd.f32 %v173, %v188
    %v206 = vadd.f32 %v174, %v193
    %v207 = vadd.f32 %v175, %v198
    %v208 = vadd.f32 %v176, %v203
    %v209 = vadd.f32 %v177, %v188
    %v210 = vadd.f32 %v178, %v193
    %v211 = vadd.f32 %v179, %v198
    %v212 = vadd.f32 %v180, %v203
    %v213 = vmul.f32 %v205, 0.5
    %v214 = vmul.f32 %v206, 0.5
    %v215 = vmul.f32 %v207, 0.5
    %v216 = vmul.f32 %v208, 0.5
    %v217 = vmul.f32 %v209, 0.5
    %v218 = vmul.f32 %v210, 0.5
    %v219 = vmul.f32 %v211, 0.5
    %v220 = vmul.f32 %v212, 0.5
    %v221 = vmul.f32 %v205, 0.70710677
    %v222 = vmul.f32 %v206, 0.70710677
    %v223 = vmul.f32 %v207, 0.70710677
    %v224 = vmul.f32 %v208, 0.70710677
    %v225 = vmul.f32 %v209, 0.70710677
    %v226 = vmul.f32 %v210, 0.70710677
    %v227 = vmul.f32 %v211, 0.70710677
    %v228 = vmul.f32 %v212, 0.70710677
    %v229 = vand.u32 2147483647, %v221
    %v230 = vand.u32 2147483647, %v222
    %v231 = vand.u32 2147483647, %v223
    %v232 = vand.u32 2147483647, %v224
    %v233 = vand.u32 2147483647, %v225
    %v234 = vand.u32 2147483647, %v226
    %v235 = vand.u32 2147483647, %v227
    %v236 = vand.u32 2147483647, %v228
    %v237 = vmul.f32 %v229, 0.3275911
    %v238 = vmul.f32 %v230, 0.3275911
    %v239 = vmul.f32 %v231, 0.3275911
    %v240 = vmul.f32 %v232, 0.3275911
    %v241 = vmul.f32 %v233, 0.3275911
    %v242 = vmul.f32 %v234, 0.3275911
    %v243 = vmul.f32 %v235, 0.3275911
    %v244 = vmul.f32 %v236, 0.3275911
    %v245 = vadd.f32 %v237, 1.0
    %v246 = vadd.f32 %v238, 1.0
    %v247 = vadd.f32 %v239, 1.0
    %v248 = vadd.f32 %v240, 1.0
    %v249 = vadd.f32 %v241, 1.0
    %v250 = vadd.f32 %v242, 1.0
    %v251 = vadd.f32 %v243, 1.0
    %v252 = vadd.f32 %v244, 1.0
    %v253 = vrcp.pop %v245
    %v254 = vmul.f32 1.0, %v253
    %v255 = vrcp.pop %v246
    %v256 = vmul.f32 1.0, %v255
    %v257 = vrcp.pop %v247
    %v258 = vmul.f32 1.0, %v257
    %v259 = vrcp.pop %v248
    %v260 = vmul.f32 1.0, %v259
    %v261 = vrcp.pop %v249
    %v262 = vmul.f32 1.0, %v261
    %v263 = vrcp.pop %v250
    %v264 = vmul.f32 1.0, %v263
    %v265 = vrcp.pop %v251
    %v266 = vmul.f32 1.0, %v265
    %v267 = vrcp.pop %v252
    %v268 = vmul.f32 1.0, %v267
    %v269 = vmul.f32 %v254, 1.0614054
    %v270 = vmul.f32 %v256, 1.0614054
    %v271 = vmul.f32 %v258, 1.0614054
    %v272 = vmul.f32 %v260, 1.0614054
    %v273 = vmul.f32 %v262, 1.0614054
    %v274 = vmul.f32 %v264, 1.0614054
    %v275 = vmul.f32 %v266, 1.0614054
    %v276 = vmul.f32 %v268, 1.0614054
    %v277 = vadd.f32 %v269, -1.4531521
    %v278 = vadd.f32 %v270, -1.4531521
    %v279 = vadd.f32 %v271, -1.4531521
    %v280 = vadd.f32 %v272, -1.4531521
    %v281 = vadd.f32 %v273, -1.4531521
    %v282 = vadd.f32 %v274, -1.4531521
    %v283 = vadd.f32 %v275, -1.4531521
    %v284 = vadd.f32 %v276, -1.4531521
    %v285 = vmul.f32 %v277, %v254
    %v286 = vmul.f32 %v278, %v256
    %v287 = vmul.f32 %v279, %v258
    %v288 = vmul.f32 %v280, %v260
    %v289 = vmul.f32 %v281, %v262
    %v290 = vmul.f32 %v282, %v264
    %v291 = vmul.f32 %v283, %v266
    %v292 = vmul.f32 %v284, %v268
    %v293 = vadd.f32 %v285, 1.4214138
    %v294 = vadd.f32 %v286, 1.4214138
    %v295 = vadd.f32 %v287, 1.4214138
    %v296 = vadd.f32 %v288, 1.4214138
    %v297 = vadd.f32 %v289, 1.4214138
    %v298 = vadd.f32 %v290, 1.4214138
    %v299 = vadd.f32 %v291, 1.4214138
    %v300 = vadd.f32 %v292, 1.4214138
    %v301 = vmul.f32 %v293, %v254
    %v302 = vmul.f32 %v294, %v256
    %v303 = vmul.f32 %v295, %v258
    %v304 = vmul.f32 %v296, %v260
    %v305 = vmul.f32 %v297, %v262
    %v306 = vmul.f32 %v298, %v264
    %v307 = vmul.f32 %v299, %v266
    %v308 = vmul.f32 %v300, %v268
    %v309 = vadd.f32 %v301, -0.28449672
    %v310 = vadd.f32 %v302, -0.28449672
    %v311 = vadd.f32 %v303, -0.28449672
    %v312 = vadd.f32 %v304, -0.28449672
    %v313 = vadd.f32 %v305, -0.28449672
    %v314 = vadd.f32 %v306, -0.28449672
    %v315 = vadd.f32 %v307, -0.28449672
    %v316 = vadd.f32 %v308, -0.28449672
    %v317 = vmul.f32 %v309, %v254
    %v318 = vmul.f32 %v310, %v256
    %v319 = vmul.f32 %v311, %v258
    %v320 = vmul.f32 %v312, %v260
    %v321 = vmul.f32 %v313, %v262
    %v322 = vmul.f32 %v314, %v264
    %v323 = vmul.f32 %v315, %v266
    %v324 = vmul.f32 %v316, %v268
    %v325 = vadd.f32 %v317, 0.2548296
    %v326 = vadd.f32 %v318, 0.2548296
    %v327 = vadd.f32 %v319, 0.2548296
    %v328 = vadd.f32 %v320, 0.2548296
    %v329 = vadd.f32 %v321, 0.2548296
    %v330 = vadd.f32 %v322, 0.2548296
    %v331 = vadd.f32 %v323, 0.2548296
    %v332 = vadd.f32 %v324, 0.2548296
    %v333 = vmul.f32 %v325, %v254
    %v334 = vmul.f32 %v326, %v256
    %v335 = vmul.f32 %v327, %v258
    %v336 = vmul.f32 %v328, %v260
    %v337 = vmul.f32 %v329, %v262
    %v338 = vmul.f32 %v330, %v264
    %v339 = vmul.f32 %v331, %v266
    %v340 = vmul.f32 %v332, %v268
    %v341 = vmul.f32 %v229, %v229
    %v342 = vmul.f32 %v230, %v230
    %v343 = vmul.f32 %v231, %v231
    %v344 = vmul.f32 %v232, %v232
    %v345 = vmul.f32 %v233, %v233
    %v346 = vmul.f32 %v234, %v234
    %v347 = vmul.f32 %v235, %v235
    %v348 = vmul.f32 %v236, %v236
    %v349 = vsub.f32 0.0, %v341
    %v350 = vsub.f32 0.0, %v342
    %v351 = vsub.f32 0.0, %v343
    %v352 = vsub.f32 0.0, %v344
    %v353 = vsub.f32 0.0, %v345
    %v354 = vsub.f32 0.0, %v346
    %v355 = vsub.f32 0.0, %v347
    %v356 = vsub.f32 0.0, %v348
    %v357 = vmul.f32 %v349, 1.442695
    %v358 = vpow.pop %v357
    %v359 = vmul.f32 %v350, 1.442695
    %v360 = vpow.pop %v359
    %v361 = vmul.f32 %v351, 1.442695
    %v362 = vpow.pop %v361
    %v363 = vmul.f32 %v352, 1.442695
    %v364 = vpow.pop %v363
    %v365 = vmul.f32 %v353, 1.442695
    %v366 = vpow.pop %v365
    %v367 = vmul.f32 %v354, 1.442695
    %v368 = vpow.pop %v367
    %v369 = vmul.f32 %v355, 1.442695
    %v370 = vpow.pop %v369
    %v371 = vmul.f32 %v356, 1.442695
    %v372 = vpow.pop %v371
    %v373 = vmul.f32 %v333, %v358
    %v374 = vmul.f32 %v334, %v360
    %v375 = vmul.f32 %v335, %v362
    %v376 = vmul.f32 %v336, %v364
    %v377 = vmul.f32 %v337, %v366
    %v378 = vmul.f32 %v338, %v368
    %v379 = vmul.f32 %v339, %v370
    %v380 = vmul.f32 %v340, %v372
    %v381 = vsub.f32 1.0, %v373
    %v382 = vsub.f32 1.0, %v374
    %v383 = vsub.f32 1.0, %v375
    %v384 = vsub.f32 1.0, %v376
    %v385 = vsub.f32 1.0, %v377
    %v386 = vsub.f32 1.0, %v378
    %v387 = vsub.f32 1.0, %v379
    %v388 = vsub.f32 1.0, %v380
    %vm389 = vcmp.lt.f32.partialorder %v221, 0.0
    %vm390 = vcmp.lt.f32.partialorder %v222, 0.0
    %vm391 = vcmp.lt.f32.partialorder %v223, 0.0
    %vm392 = vcmp.lt.f32.partialorder %v224, 0.0
    %vm393 = vcmp.lt.f32.partialorder %v225, 0.0
    %vm394 = vcmp.lt.f32.partialorder %v226, 0.0
    %vm395 = vcmp.lt.f32.partialorder %v227, 0.0
    %vm396 = vcmp.lt.f32.partialorder %v228, 0.0
    %v397 = vsub.f32 0.0, %v381
    %v398 = vsub.f32 0.0, %v382
    %v399 = vsub.f32 0.0, %v383
    %v400 = vsub.f32 0.0, %v384
    %v401 = vsub.f32 0.0, %v385
    %v402 = vsub.f32 0.0, %v386
    %v403 = vsub.f32 0.0, %v387
    %v404 = vsub.f32 0.0, %v388
    %v405 = vsel %vm389, %v397, %v381
    %v406 = vsel %vm390, %v398, %v382
    %v407 = vsel %vm391, %v399, %v383
    %v408 = vsel %vm392, %v400, %v384
    %v409 = vsel %vm393, %v401, %v385
    %v410 = vsel %vm394, %v402, %v386
    %v411 = vsel %vm395, %v403, %v387
    %v412 = vsel %vm396, %v404, %v388
    %v413 = vadd.f32 %v405, 1.0
    %v414 = vadd.f32 %v406, 1.0
    %v415 = vadd.f32 %v407, 1.0
    %v416 = vadd.f32 %v408, 1.0
    %v417 = vadd.f32 %v409, 1.0
    %v418 = vadd.f32 %v410, 1.0
    %v419 = vadd.f32 %v411, 1.0
    %v420 = vadd.f32 %v412, 1.0
    %v421 = vmul.f32 %v213, %v413
    %v422 = vmul.f32 %v214, %v414
    %v423 = vmul.f32 %v215, %v415
    %v424 = vmul.f32 %v216, %v416
    %v425 = vmul.f32 %v217, %v417
    %v426 = vmul.f32 %v218, %v418
    %v427 = vmul.f32 %v219, %v419
    %v428 = vmul.f32 %v220, %v420
    %429 = vst.msk [vmem:[#allocation8] sm:$0xff] %vm64, %v421
    %430 = vst.msk [vmem:[#allocation8 + $0x8] sm:$0xff] %vm64, %v422
    %431 = vst.msk [vmem:[#allocation8 + $0x10] sm:$0xff] %vm64, %v423
    %432 = vst.msk [vmem:[#allocation8 + $0x18] sm:$0xff] %vm64, %v424
    %433 = vst.msk [vmem:[#allocation8 + $0x20] sm:$0xff] %vm64, %v425
    %434 = vst.msk [vmem:[#allocation8 + $0x28] sm:$0xff] %vm64, %v426
    %435 = vst.msk [vmem:[#allocation8 + $0x30] sm:$0xff] %vm64, %v427
    %436 = vst.msk [vmem:[#allocation8 + $0x38] sm:$0xff] %vm64, %v428
    // Predicated region
    $region26: #{layer_norm_gelu.1} parent=1 // pred_check
      _
    $region27: #{layer_norm_gelu.1} parent=1 // pred_check_branch
      %438 = sbr.rel (0) target = $region29
    $region28: #{layer_norm_gelu.1} parent=1 // pred_region
      %s440 = ssub.s32 1024, 1024
      %441 = vsyncadd [#allocation4], %s440
      %s442 = sshll.u32 [#allocation8], 4
      %s443 = int_to_ptr.vmem [resolvable:$true] %s442
      %448 = dma.vmem_to_hbm [thread:$0]  %s443, 1024, %s3, [#allocation4], 128, 128, 8
    $region29: #{layer_norm_gelu.1} parent=1 // pred_fallthru
      _
    // Predicated region
    $region30: #{layer_norm_gelu.1} parent=1 // pred_check
      _
    $region31: #{layer_norm_gelu.1} parent=1 // pred_check_branch
      %450 = sbr.rel (0) target = $region33
    $region32: #{layer_norm_gelu.1} parent=1 // pred_region
      %451 = dma.done [#allocation4], 1024
    $region33: #{layer_norm_gelu.1} parent=1 // pred_fallthru
      _
    %452 = vsyncpa [#allocation3], 1
    %453 = vsyncpa [#allocation6], 1
    %454 = vsyncpa [#allocation4], 1

</llo_original>
